<compile_context>
chip_gen: v7x
topology: tpu7x:2x2x1
jax: 0.10.0
libtpu: 0.0.40
codegen_flags: <defaults>
</compile_context>

<pallas_src>
import functools
import math

import jax
import jax.numpy as jnp
from jax import lax
from jax.experimental import pallas as pl
from jax.experimental.pallas import tpu as pltpu


# ---------------------------------------------------------------------------
# Kernel
# ---------------------------------------------------------------------------
def layer_norm_kernel(x_ref, w_ref, o_ref, *, eps, groups_per_row, group_len):
    # x_ref: (tm, groups_per_row * group_len)  lane-dense row tile
    # w_ref: (tm, groups_per_row)              per-group channel scale (f32)
    x = x_ref[...].astype(jnp.float32)
    w = w_ref[...].astype(jnp.float32)

    if groups_per_row == 1:
        # Common case: each row is one (n, c) normalization group.
        mean = jnp.mean(x, axis=-1, keepdims=True)     # XLU cross-lane reduce
        xc = x - mean
        var = jnp.mean(xc * xc, axis=-1, keepdims=True)
        inv = lax.rsqrt(var + eps)                     # EUP slot (free vs VPU)
        y = xc * (inv * w)                             # fold scale -> one mul
        o_ref[...] = y.astype(o_ref.dtype)
    else:
        # Lane-dense repack path: each row holds `groups_per_row` groups.
        tm = x.shape[0]
        x3 = x.reshape(tm, groups_per_row, group_len)
        mean = jnp.mean(x3, axis=-1, keepdims=True)
        xc = x3 - mean
        var = jnp.mean(xc * xc, axis=-1, keepdims=True)
        inv = lax.rsqrt(var + eps)
        y = xc * (inv * w[..., None])
        o_ref[...] = y.reshape(tm, groups_per_row * group_len).astype(o_ref.dtype)


# ---------------------------------------------------------------------------
# Tiling helpers
# ---------------------------------------------------------------------------
def _sublane_pack(dtype) -> int:
    """Sublane packing factor for the dtype: 8 (f32), 16 (bf16/f16), 32 (int8)."""
    itemsize = jnp.dtype(dtype).itemsize
    return {4: 8, 2: 16, 1: 32}.get(itemsize, 8)


def _choose_tm(m_rows, lane_width, itemsize, sublane,
               target_tile_bytes=2 * 1024 * 1024,   # ~2 MiB x tile (HBM roofline plateau)
               vmem_tile_budget=24 * 1024 * 1024,   # double-buffered in+out, v7x-safe
               min_splits=4):
    """Byte-budgeted row-tile size, rounded to the dtype sublane packing."""
    if m_rows <= sublane:
        return m_rows  # block == full dim; always a legal BlockSpec
    row_bytes = lane_width * itemsize
    tm = max(target_tile_bytes // row_bytes, 1)
    # in + out tiles, each double-buffered: 4 * tile_bytes <= budget
    tm = min(tm, max(vmem_tile_budget // (4 * row_bytes), 1))
    # keep >= min_splits grid steps: DMA/compute overlap + v7x megacore sharding
    rows_per_split = -(-m_rows // min_splits)
    tm = min(tm, max(rows_per_split, sublane))
    tm = max((tm // sublane) * sublane, sublane)
    return min(tm, m_rows)


# ---------------------------------------------------------------------------
# Wrapper
# ---------------------------------------------------------------------------
def layer_norm(x_nchw, weight, *, eps=1e-5):
    """x_nchw: (N, C, H, W); weight: (C, 1, 1) per-channel scale."""
    N, C, H, W = x_nchw.shape
    assert weight.shape == (C, 1, 1)
    M, L = N * C, H * W
    dtype = x_nchw.dtype
    itemsize = jnp.dtype(dtype).itemsize
    sublane = _sublane_pack(dtype)

    # Per-channel scale -> per-(n, c)-row scale (tiny: M floats).
    w_rows = jnp.broadcast_to(weight.reshape(1, C), (N, C)).reshape(M)
    w_rows = w_rows.astype(jnp.float32)

    # Lane-dense repack when L is not a multiple of 128: pack k consecutive
    # rows per slab (contiguous reshape, no data movement) so stores are
    # unmasked full-vreg writes.  For L=256 this is a no-op (k=1).
    k = 128 // math.gcd(L, 128)
    groups_per_row = k if (k > 1 and M % k == 0) else 1
    m_rows = M // groups_per_row
    lane_width = groups_per_row * L

    x2d = x_nchw.reshape(m_rows, lane_width)
    w2d = w_rows.reshape(m_rows, groups_per_row)

    tm = _choose_tm(m_rows, lane_width, itemsize, sublane)
    grid = pl.cdiv(m_rows, tm)   # ragged last tile is fine: rows are independent
                                 # and OOB output rows are discarded by Pallas.

    kernel = functools.partial(layer_norm_kernel, eps=eps,
                               groups_per_row=groups_per_row, group_len=L)

    out2d = pl.pallas_call(
        kernel,
        out_shape=jax.ShapeDtypeStruct((m_rows, lane_width), dtype),
        grid_spec=pltpu.PrefetchScalarGridSpec(
            num_scalar_prefetch=0,
            grid=(grid,),
            in_specs=[
                pl.BlockSpec((tm, lane_width), lambda i: (i, 0)),      # x row tile
                pl.BlockSpec((tm, groups_per_row), lambda i: (i, 0)),  # per-row scale
            ],
            out_specs=pl.BlockSpec((tm, lane_width), lambda i: (i, 0)),
        ),
        compiler_params=pltpu.CompilerParams(
            dimension_semantics=("parallel",),
            # Explicit scoped-VMEM limit: safe on all generations (v5e default
            # is only 16 MiB; v7x physical is 64 MiB per TC).
            vmem_limit_bytes=32 * 1024 * 1024,
        ),
        cost_estimate=pl.CostEstimate(
            flops=5 * M * L,
            transcendentals=M,
            bytes_accessed=2 * M * L * itemsize + M * 4,
        ),
    )(x2d, w2d)

    return out2d.reshape(N, C, H, W)


# ---------------------------------------------------------------------------
# Pure-JAX reference of the PyTorch forward pass
# ---------------------------------------------------------------------------
def layer_norm_ref(x_nchw, weight, eps=1e-5):
    x = x_nchw.astype(jnp.float32)
    mean = jnp.mean(x, axis=(-2, -1), keepdims=True)
    var = jnp.mean((x - mean) ** 2, axis=(-2, -1), keepdims=True)
    y = (x - mean) / jnp.sqrt(var + eps)
    y = y * weight.reshape(1, -1, 1, 1).astype(jnp.float32)
    return y.astype(x_nchw.dtype)


if __name__ == "__main__":
    key = jax.random.PRNGKey(0)
    k_x, k_w = jax.random.split(key)

    # Small shapes consistent with the module: batch=2, channels=4, spatial=16.
    N, C, H, W = 2, 4, 16, 16
    x = jax.random.normal(k_x, (N, C, H, W), dtype=jnp.float32)
    # Module initializes weight to ones; perturb it so the scale path is exercised.
    weight = 1.0 + 0.1 * jax.random.normal(k_w, (C, 1, 1), dtype=jnp.float32)

    out = layer_norm(x, weight)
    out = jax.block_until_ready(out)

    ref = layer_norm_ref(x, weight)
    assert out.shape == (N, C, H, W)
    assert jnp.allclose(out, ref, atol=1e-4, rtol=1e-4)

    print("KERNEL_OK")
</pallas_src>

<mosaic_0001>
module attributes {stable_mosaic.version = 11 : i64} {
  func.func @layer_norm_kernel(%arg0: i32, %arg1: memref<8x256xf32, #tpu.memory_space<vmem>>, %arg2: memref<8x1xf32, #tpu.memory_space<vmem>>, %arg3: memref<8x256xf32, #tpu.memory_space<vmem>>) attributes {dimension_semantics = [#tpu.dimension_semantics<parallel>], iteration_bounds = array<i64: 1>, scalar_prefetch = 0 : i64, scratch_operands = 0 : i64, tpu.core_type = #tpu.core_type<tc>, window_params = [{transform_indices = @transform_0, window_bounds = array<i64: 8, 256>}, {transform_indices = @transform_1, window_bounds = array<i64: 8, 1>}, {transform_indices = @transform_2, window_bounds = array<i64: 8, 256>}]} {
    %c0 = arith.constant 0 : index
    %c0_0 = arith.constant 0 : index
    %0 = vector.load %arg1[%c0, %c0_0] : memref<8x256xf32, #tpu.memory_space<vmem>>, vector<8x256xf32>
    %c0_1 = arith.constant 0 : index
    %c0_2 = arith.constant 0 : index
    %1 = vector.load %arg2[%c0_1, %c0_2] : memref<8x1xf32, #tpu.memory_space<vmem>>, vector<8x1xf32>
    %cst = arith.constant dense<0.000000e+00> : vector<8xf32>
    %2 = vector.multi_reduction <add>, %0, %cst [1] : vector<8x256xf32> to vector<8xf32>
    %3 = vector.shape_cast %2 : vector<8xf32> to vector<8x1xf32>
    %cst_3 = arith.constant 2.560000e+02 : f32
    %4 = vector.broadcast %cst_3 : f32 to vector<8x1xf32>
    %5 = arith.divf %3, %4 : vector<8x1xf32>
    %6 = vector.broadcast %5 : vector<8x1xf32> to vector<8x256xf32>
    %7 = arith.subf %0, %6 : vector<8x256xf32>
    %8 = arith.mulf %7, %7 : vector<8x256xf32>
    %cst_4 = arith.constant dense<0.000000e+00> : vector<8xf32>
    %9 = vector.multi_reduction <add>, %8, %cst_4 [1] : vector<8x256xf32> to vector<8xf32>
    %10 = vector.shape_cast %9 : vector<8xf32> to vector<8x1xf32>
    %cst_5 = arith.constant 2.560000e+02 : f32
    %11 = vector.broadcast %cst_5 : f32 to vector<8x1xf32>
    %12 = arith.divf %10, %11 : vector<8x1xf32>
    %cst_6 = arith.constant 9.99999974E-6 : f32
    %13 = vector.broadcast %cst_6 : f32 to vector<8x1xf32>
    %14 = arith.addf %12, %13 : vector<8x1xf32>
    %15 = math.rsqrt %14 : vector<8x1xf32>
    %16 = arith.mulf %15, %1 : vector<8x1xf32>
    %17 = vector.broadcast %16 : vector<8x1xf32> to vector<8x256xf32>
    %18 = arith.mulf %7, %17 : vector<8x256xf32>
    %c0_7 = arith.constant 0 : index
    %c0_8 = arith.constant 0 : index
    %19 = vector.load %arg3[%c0_7, %c0_8] : memref<8x256xf32, #tpu.memory_space<vmem>>, vector<8x256xf32>
    tpu.vector_store %arg3[%c0_7, %c0_8], %18 {strides = array<i32>} : memref<8x256xf32, #tpu.memory_space<vmem>>, vector<8x256xf32>,
    return
  }
  func.func @transform_0(%arg0: i32) -> (i32, i32) {
    %c0_i32 = arith.constant 0 : i32
    %c0_i32_0 = arith.constant 0 : i32
    return %arg0, %c0_i32 : i32, i32
  }
  func.func @transform_1(%arg0: i32) -> (i32, i32) {
    %c0_i32 = arith.constant 0 : i32
    %c0_i32_0 = arith.constant 0 : i32
    return %arg0, %c0_i32 : i32, i32
  }
  func.func @transform_2(%arg0: i32) -> (i32, i32) {
    %c0_i32 = arith.constant 0 : i32
    %c0_i32_0 = arith.constant 0 : i32
    return %arg0, %c0_i32 : i32, i32
  }
}

</mosaic_0001>

<llo_original>
// kernel: tpu_custom_call.1
$region0: #{tpu_custom_call.1}
  #allocation0 [shape = 'u32[]', space=smem, size = 0x4, offset = 0x4, fixed_abs, tag = 'smem constant byte address 0x4 - core index']
  #allocation1 [shape = 'u32[144,128]{1,0:T(1,128)}', space=vmem, size = 0x12000, scoped, tag = 'internal scratch']
  %s0 = inlined_call_operand.hbm [shape: f32[8,256], index: 0, kind: input, shape index: {}]
  %s1 = inlined_call_operand.vmem [shape: f32[8,1], index: 1, kind: input, shape index: {}]
  %s2 = inlined_call_operand.hbm [shape: f32[8,256], index: 2, kind: output, shape index: {}]
  %s3 = sld [smem:[#allocation0]]
  $region22: #{tpu_custom_call.1} parent=0
    _
  %s5 = ssub.s32 1, %s3
  %s6 = scalar_select 0, %s5, %s3
  $region1: #{tpu_custom_call.1} parent=0
    #allocation2 [shape = 'u8[8192]{0}', space=vmem, size = 0x2000, scoped, tag = 'input window, operand 0, single buffered']
    #allocation3 [shape = 's32[1]{0}', space=sflag, size = 0x4, scoped, tag = 'scoped memory for tpu_custom_call.1']
    #allocation4 [shape = 's32[1]{0}', space=sflag, size = 0x4, scoped, tag = 'scoped memory for tpu_custom_call.1']
    #allocation5 [shape = 'u8[8192]{0}', space=vmem, size = 0x2000, scoped, tag = 'output window, operand 0, single buffered']
    %7 = vsyncpa [#allocation3], 0
    %8 = vsyncpa [#allocation4], 0
    // Predicated region
    $region2: #{tpu_custom_call.1} parent=1 // pred_check
      _
    $region3: #{tpu_custom_call.1} parent=1 // pred_check_branch
      %10 = sbr.rel (0) target = $region5
    $region4: #{tpu_custom_call.1} parent=1 // pred_region
      %s12 = ssub.s32 256, 256
      %13 = vsyncadd [#allocation3], %s12
      %s15 = sshll.u32 [#allocation2], 4
      %s16 = int_to_ptr.vmem [resolvable:$true] %s15
      %18 = dma.hbm_to_vmem [thread:$0]  %s0, 256, %s16, [#allocation3]
    $region5: #{tpu_custom_call.1} parent=1 // pred_fallthru
      _
    // Predicated region
    $region6: #{tpu_custom_call.1} parent=1 // pred_check
      _
    $region7: #{tpu_custom_call.1} parent=1 // pred_check_branch
      %20 = sbr.rel (0) target = $region9
    $region8: #{tpu_custom_call.1} parent=1 // pred_region
      _
    $region9: #{tpu_custom_call.1} parent=1 // pred_fallthru
      _
    // Predicated region
    $region10: #{tpu_custom_call.1} parent=1 // pred_check
      _
    $region11: #{tpu_custom_call.1} parent=1 // pred_check_branch
      %22 = sbr.rel (0) target = $region13
    $region12: #{tpu_custom_call.1} parent=1 // pred_region
      %23 = dma.done [#allocation3], 256
    $region13: #{tpu_custom_call.1} parent=1 // pred_fallthru
      _
    %v24 = vld [vmem:[#allocation2] sm:$0xff]
    %v25 = vld [vmem:[#allocation2 + $0x8] sm:$0xff]
    %v26 = vld [vmem:[%s1] sm:$0xff]
    %v27 = vadd.f32 %v24, %v25
    %28 = vadd.xlane.f32.xlu0 %v27
    %v29 = vpop.xlane.xlu0 %28
    %v30 = vrcp.pop 256.0
    %v31 = vmul.f32 %v29, %v30
    %v32 = vsub.f32 %v24, %v31
    %v33 = vsub.f32 %v25, %v31
    %v34 = vmul.f32 %v32, %v32
    %v35 = vmul.f32 %v33, %v33
    %v36 = vadd.f32 %v34, %v35
    %37 = vadd.xlane.f32.xlu0 %v36
    %v38 = vpop.xlane.xlu0 %37
    %v39 = vmul.f32 %v38, %v30
    %v40 = vadd.f32 %v39, 1e-05
    %v41 = vrsqrt.pop %v40
    %v42 = vmul.f32 %v41, %v26
    %44 = vset.pattern.permute.xlu0 0
    %45 = vperm.xlu0 %44, %v42
    %v46 = vpop.permute.xlu0 %45
    %v48 = vmul.f32 %v32, %v46
    %v49 = vmul.f32 %v33, %v46
    %50 = vst [vmem:[#allocation5] sm:$0xff] %v48
    %51 = vst [vmem:[#allocation5 + $0x8] sm:$0xff] %v49
    // Predicated region
    $region14: #{tpu_custom_call.1} parent=1 // pred_check
      _
    $region15: #{tpu_custom_call.1} parent=1 // pred_check_branch
      %53 = sbr.rel (0) target = $region17
    $region16: #{tpu_custom_call.1} parent=1 // pred_region
      %s55 = ssub.s32 256, 256
      %56 = vsyncadd [#allocation4], %s55
      %s58 = sshll.u32 [#allocation5], 4
      %s59 = int_to_ptr.vmem [resolvable:$true] %s58
      %61 = dma.vmem_to_hbm [thread:$0]  %s59, 256, %s2, [#allocation4]
    $region17: #{tpu_custom_call.1} parent=1 // pred_fallthru
      _
    // Predicated region
    $region18: #{tpu_custom_call.1} parent=1 // pred_check
      _
    $region19: #{tpu_custom_call.1} parent=1 // pred_check_branch
      %63 = sbr.rel (0) target = $region21
    $region20: #{tpu_custom_call.1} parent=1 // pred_region
      %64 = dma.done [#allocation4], 256
    $region21: #{tpu_custom_call.1} parent=1 // pred_fallthru
      _
    %65 = vsyncpa [#allocation3], 1
    %66 = vsyncpa [#allocation4], 1

</llo_original>
